<compile_context>
chip_gen: v6e
topology: v6e:2x2x1
jax: 0.10.0
libtpu: 0.0.40
codegen_flags: <defaults>
</compile_context>

<pallas_src>
import functools

import jax
import jax.numpy as jnp
from jax.experimental import pallas as pl
from jax.experimental.pallas import tpu as pltpu


_LANE = 128
_TARGET_BLOCK_BYTES = 8 * 1024 * 1024   # ~8 MiB tiles; 4 pipeline buffers = 32 MiB
_VMEM_LIMIT_BYTES = 48 * 1024 * 1024    # < 64 MiB physical (v7x), << 128 MiB (v5e/v6e)
_SMALL_INPUT_BYTES = 256 * 1024         # below this, fused jnp.cos is strictly faster


def _cos_kernel(x_ref, o_ref):
    # Elementwise cosine on the whole VMEM tile (VPU range reduction +
    # polynomial).  HBM-bound on v5e/v6e; roughly VALU-bound on v7x, where the
    # two-TensorCore grid split in the wrapper is the main lever.
    o_ref[...] = jnp.cos(x_ref[...])


def _round_up(a: int, b: int) -> int:
    return pl.cdiv(a, b) * b


@functools.lru_cache(maxsize=1)
def _tensorcores_per_chip() -> int:
    """Best-effort TensorCore count per chip (v7x has 2; v5e/v6e have 1)."""
    try:
        kind = jax.devices()[0].device_kind.lower()
    except Exception:  # defensive: never let detection break the kernel
        return 1
    return 2 if ("v7" in kind or "7x" in kind) else 1


def _compiler_params() -> pltpu.CompilerParams:
    return pltpu.CompilerParams(
        dimension_semantics=("parallel",),
        vmem_limit_bytes=_VMEM_LIMIT_BYTES,
    )


def _cos_2d(x_flat: jax.Array, itemsize: int, sub: int, ncores: int) -> jax.Array:
    """n % 128 == 0 path: widest contiguous lane view, row-blocked 1-D grid."""
    n = x_flat.shape[0]
    w = _LANE
    for cand in (4096, 2048, 1024, 512, 256):
        if n % cand == 0:
            w = cand
            break
    rows = n // w
    x2d = x_flat.reshape(rows, w)            # contiguous reshape: no copy

    row_bytes = w * itemsize
    max_rows = max(sub, (_TARGET_BLOCK_BYTES // row_bytes) // sub * sub)
    # Whole array in one full-height block if it fits the ~8 MiB target
    # (block dim == full array dim is always legal).
    tile_r = rows if rows <= max_rows else max_rows

    if ncores >= 2 and rows > sub:
        # v7x: make sure both TensorCores get work — force >=2 grid steps and
        # prefer an even step count so neither core idles.
        steps = pl.cdiv(rows, tile_r)
        if steps < 2:
            tile_r = max(sub, _round_up(pl.cdiv(rows, 2), sub))
        elif steps % 2 == 1:
            cand = max(sub, (rows // (steps + 1)) // sub * sub)
            if pl.cdiv(rows, cand) % 2 == 0:
                tile_r = cand

    grid = (pl.cdiv(rows, tile_r),)
    out2d = pl.pallas_call(
        _cos_kernel,
        out_shape=jax.ShapeDtypeStruct((rows, w), x2d.dtype),
        grid=grid,
        in_specs=[pl.BlockSpec((tile_r, w), lambda i: (i, 0))],
        out_specs=pl.BlockSpec((tile_r, w), lambda i: (i, 0)),
        compiler_params=_compiler_params(),
    )(x2d)
    return out2d.reshape(-1)


def _cos_1d(x_flat: jax.Array, itemsize: int, ncores: int) -> jax.Array:
    """Ragged path (n % 128 != 0): 1-D grid; Pallas masks the partial last block.

    Replaces the old whole-array jnp.pad + output slice (two extra HBM passes).
    The tail of the last block reads out-of-bounds garbage and is masked on
    store, which is harmless for a pure elementwise op.
    """
    n = x_flat.shape[0]
    padded = _round_up(n, _LANE)
    max_elems = max(_LANE, (_TARGET_BLOCK_BYTES // itemsize) // _LANE * _LANE)
    tile = min(max_elems, padded)

    if ncores >= 2 and padded > _LANE and pl.cdiv(n, tile) < 2:
        # v7x: split so both TensorCores get work.
        tile = max(_LANE, _round_up(pl.cdiv(padded, 2), _LANE))

    grid = (pl.cdiv(n, tile),)
    return pl.pallas_call(
        _cos_kernel,
        out_shape=jax.ShapeDtypeStruct((n,), x_flat.dtype),
        grid=grid,
        in_specs=[pl.BlockSpec((tile,), lambda i: (i,))],
        out_specs=pl.BlockSpec((tile,), lambda i: (i,)),
        compiler_params=_compiler_params(),
    )(x_flat)


def cosine_activation(x: jax.Array, *,
                      min_pallas_bytes: int = _SMALL_INPUT_BYTES) -> jax.Array:
    """Elementwise cos(x); semantics identical to torch.cos(X) for float inputs.

    `min_pallas_bytes` gates the Pallas path: smaller inputs use XLA's fused
    jnp.cos directly (kernel dispatch + pipeline overhead would dominate).
    Pass 0 to force the Pallas kernel (used by the demo below).
    """
    if x.size == 0 or not jnp.issubdtype(x.dtype, jnp.floating):
        # Kernel supports floating dtypes only; empty / non-float inputs take
        # JAX's native cos semantics.
        return jnp.cos(x)

    n = x.size
    itemsize = jnp.dtype(x.dtype).itemsize
    if n * itemsize < min_pallas_bytes:
        return jnp.cos(x)                     # small-input fast path

    sub = max(8, 32 // itemsize)              # min sublane multiple: f32->8, bf16->16
    ncores = _tensorcores_per_chip()
    x_flat = x.reshape(-1)
    if n % _LANE == 0:
        out_flat = _cos_2d(x_flat, itemsize, sub, ncores)
    else:
        out_flat = _cos_1d(x_flat, itemsize, ncores)
    return out_flat.reshape(x.shape)


if __name__ == "__main__":
    key = jax.random.PRNGKey(0)
    k0, k1, k2 = jax.random.split(key, 3)

    # Shape consistent with SpectralMapBlock's activation: (batch=2, C=25, Units=64).
    x = jax.random.normal(k0, (2, 25, 64), dtype=jnp.float32)

    # Force the Pallas kernel (input is tiny, so the default config would take
    # the jnp.cos fast path).
    y = jax.block_until_ready(cosine_activation(x, min_pallas_bytes=0))
    ref = jnp.cos(x)
    assert y.shape == x.shape and y.dtype == x.dtype
    assert jnp.allclose(y, ref, atol=1e-5, rtol=1e-5)

    # Default config: small-input fast path must match bit-for-bit semantics.
    y_fast = jax.block_until_ready(cosine_activation(x))
    assert jnp.allclose(y_fast, ref, atol=1e-5, rtol=1e-5)

    # Ragged size (n % 128 != 0) exercises the 1-D masked-last-block path.
    x_rag = jax.random.normal(k1, (1, 25, 64), dtype=jnp.float32)   # n = 1600
    y_rag = jax.block_until_ready(cosine_activation(x_rag, min_pallas_bytes=0))
    assert jnp.allclose(y_rag, jnp.cos(x_rag), atol=1e-5, rtol=1e-5)

    # Large enough to take the Pallas path under the default threshold (~400 KiB).
    x_big = jax.random.normal(k2, (64, 25, 64), dtype=jnp.float32)
    y_big = jax.block_until_ready(cosine_activation(x_big))
    assert jnp.allclose(y_big, jnp.cos(x_big), atol=1e-5, rtol=1e-5)

    print("KERNEL_OK")
</pallas_src>

<mosaic_0001>
module attributes {stable_mosaic.version = 11 : i64} {
  func.func @_cos_kernel(%arg0: i32, %arg1: memref<25x128xf32, #tpu.memory_space<vmem>>, %arg2: memref<25x128xf32, #tpu.memory_space<vmem>>) attributes {dimension_semantics = [#tpu.dimension_semantics<parallel>], iteration_bounds = array<i64: 1>, scalar_prefetch = 0 : i64, scratch_operands = 0 : i64, tpu.core_type = #tpu.core_type<tc>, window_params = [{transform_indices = @transform_0, window_bounds = array<i64: 25, 128>}, {transform_indices = @transform_1, window_bounds = array<i64: 25, 128>}]} {
    %c0 = arith.constant 0 : index
    %c0_0 = arith.constant 0 : index
    %0 = vector.load %arg1[%c0, %c0_0] : memref<25x128xf32, #tpu.memory_space<vmem>>, vector<25x128xf32>
    %1 = math.cos %0 : vector<25x128xf32>
    %c0_1 = arith.constant 0 : index
    %c0_2 = arith.constant 0 : index
    %2 = vector.load %arg2[%c0_1, %c0_2] : memref<25x128xf32, #tpu.memory_space<vmem>>, vector<25x128xf32>
    tpu.vector_store %arg2[%c0_1, %c0_2], %1 {strides = array<i32>} : memref<25x128xf32, #tpu.memory_space<vmem>>, vector<25x128xf32>,
    return
  }
  func.func @transform_0(%arg0: i32) -> (i32, i32) {
    %c0_i32 = arith.constant 0 : i32
    %c0_i32_0 = arith.constant 0 : i32
    return %arg0, %c0_i32 : i32, i32
  }
  func.func @transform_1(%arg0: i32) -> (i32, i32) {
    %c0_i32 = arith.constant 0 : i32
    %c0_i32_0 = arith.constant 0 : i32
    return %arg0, %c0_i32 : i32, i32
  }
}

</mosaic_0001>

<llo_original>
// kernel: tpu_custom_call.1
$region0: #{tpu_custom_call.1}
  #allocation0 [shape = 'u32[]', space=smem, size = 0x4, offset = 0x4, fixed_abs, tag = 'smem constant byte address 0x4 - core index']
  #allocation1 [shape = 'u32[144,128]{1,0:T(1,128)}', space=vmem, size = 0x12000, scoped, tag = 'internal scratch']
  %s0 = inlined_call_operand.hbm [shape: f32[25,128], index: 0, kind: input, shape index: {}]
  %s1 = inlined_call_operand.hbm [shape: f32[25,128], index: 1, kind: output, shape index: {}]
  %s2 = sld [smem:[#allocation0]]
  $region18: #{tpu_custom_call.1} parent=0
    _
  %s4 = ssub.s32 1, %s2
  %s5 = scalar_select 0, %s4, %s2
  $region1: #{tpu_custom_call.1} parent=0
    #allocation2 [shape = 'u8[16384]{0}', space=vmem, size = 0x4000, scoped, tag = 'input window, operand 0, single buffered']
    #allocation3 [shape = 's32[1]{0}', space=sflag, size = 0x4, scoped, tag = 'scoped memory for tpu_custom_call.1']
    #allocation4 [shape = 's32[1]{0}', space=sflag, size = 0x4, scoped, tag = 'scoped memory for tpu_custom_call.1']
    #allocation5 [shape = 'u8[16384]{0}', space=vmem, size = 0x4000, scoped, tag = 'output window, operand 0, single buffered']
    %6 = vsyncpa [#allocation3], 0
    %7 = vsyncpa [#allocation4], 0
    // Predicated region
    $region2: #{tpu_custom_call.1} parent=1 // pred_check
      _
    $region3: #{tpu_custom_call.1} parent=1 // pred_check_branch
      %9 = sbr.rel (0) target = $region5
    $region4: #{tpu_custom_call.1} parent=1 // pred_region
      %s11 = ssub.s32 512, 512
      %12 = vsyncadd [#allocation3], %s11
      %s13 = sshll.u32 [#allocation2], 4
      %s14 = int_to_ptr.vmem [resolvable:$true] %s13
      %19 = dma.hbm_to_vmem [thread:$0]  %s0, 512, %s14, [#allocation3], 128, 128, 8
    $region5: #{tpu_custom_call.1} parent=1 // pred_fallthru
      _
    // Predicated region
    $region6: #{tpu_custom_call.1} parent=1 // pred_check
      _
    $region7: #{tpu_custom_call.1} parent=1 // pred_check_branch
      %21 = sbr.rel (0) target = $region9
    $region8: #{tpu_custom_call.1} parent=1 // pred_region
      %22 = dma.done [#allocation3], 512
    $region9: #{tpu_custom_call.1} parent=1 // pred_fallthru
      _
    %v23 = vld [vmem:[#allocation2] sm:$0xff]
    %v24 = vld [vmem:[#allocation2 + $0x8] sm:$0xff]
    %v25 = vld [vmem:[#allocation2 + $0x10] sm:$0xff]
    %v26 = vld [vmem:[#allocation2 + $0x18] sm:$0x1]
    %v27 = vand.u32 2147483647, %v23
    %vm28 = vcmp.le.f32.partialorder %v27, 0.7853982
    %vm29 = vcmp.lt.s32.totalorder %v23, 0
    %v30 = vand.u32 %v23, 2139095040
    %v31 = vshrl.u32 %v30, 23
    %v32 = vsub.s32 %v31, 127
    %v33 = vand.u32 2147483647, %v23
    %v34 = vand.u32 %v33, 8388607
    %v35 = vor.u32 %v34, 8388608
    %v36 = vsub.s32 0, %v35
    %v37 = vadd.s32 %v32, 1
    %vm38 = vcmp.gt.s32.totalorder %v37, 0
    %v39 = vsel %vm38, %v37, 0
    %v40 = vshrl.u32 %v39, 5
    %v41 = vand.u32 %v39, 31
    %v42 = vsub.s32 32, %v41
    %v43 = vshrl.u32 683565275, %v42
    %v44 = vshll.u32 683565275, %v41
    %v45 = vshrl.u32 2475754826, %v42
    %v46 = vor.u32 %v44, %v45
    %v47 = vshll.u32 2475754826, %v41
    %v48 = vshrl.u32 2131351028, %v42
    %v49 = vor.u32 %v47, %v48
    %v50 = vshll.u32 2131351028, %v41
    %v51 = vshrl.u32 2102212464, %v42
    %v52 = vor.u32 %v50, %v51
    %v53 = vshll.u32 2102212464, %v41
    %v54 = vshrl.u32 920167782, %v42
    %v55 = vor.u32 %v53, %v54
    %v56 = vshll.u32 920167782, %v41
    %v57 = vshrl.u32 1326507024, %v42
    %v58 = vor.u32 %v56, %v57
    %vm59 = vcmp.lt.s32.totalorder %v40, 1
    %vm60 = vcmp.lt.s32.totalorder %v40, 2
    %vm61 = vcmp.lt.s32.totalorder %v40, 3
    %vm62 = vcmp.lt.s32.totalorder %v40, 4
    %v63 = vsel %vm59, %v43, %v46
    %v64 = vsel %vm62, %v52, 2102212464
    %v65 = vsel %vm61, %v49, %v64
    %v66 = vsel %vm60, %v63, %v65
    %v67 = vsel %vm59, %v46, %v49
    %v68 = vsel %vm62, %v55, 920167782
    %v69 = vsel %vm61, %v52, %v68
    %v70 = vsel %vm60, %v67, %v69
    %v71 = vsel %vm59, %v49, %v52
    %v72 = vsel %vm62, %v58, 1326507024
    %v73 = vsel %vm61, %v55, %v72
    %v74 = vsel %vm60, %v71, %v73
    %v75 = vshll.u32 %v35, 8
    %v76 = vmul.u32.u64.compose %v75, %v74
    %v77 = vextract.low.u32 %v76
    %v78 = vextract.high.u32 %v76
    %v79 = vmul.u32.u64.compose %v75, %v70
    %v80 = vextract.low.u32 %v79
    %v81 = vextract.high.u32 %v79
    %v82 = vmul.u32 %v75, %v66
    %v83 = vadd.s32 %v78, %v80
    %vm84 = vc.u32 %v78, %v80
    %v85 = vadd.s32 %v81, 1
    %v86 = vsel %vm84, %v85, %v81
    %v87 = vadd.s32 %v82, %v86
    %v88 = vadd.s32 %v87, 536870912
    %v89 = vshrl.u32 %v88, 30
    %v90 = vshll.u32 %v89, 30
    %v91 = vsub.s32 %v87, %v90
    %vm92 = vcmp.lt.s32.totalorder %v91, 0
    %v93 = vsub.s32 0, %v91
    %v94 = vsel %vm92, %v93, %v91
    %v95 = vclz %v94
    %v96 = vsub.s32 %v95, 2
    %vm97 = vcmp.gt.s32.totalorder 0, %v96
    %v98 = vsel %vm97, 0, %v96
    %v99 = vsub.s32 32, %v98
    %v100 = vshll.u32 %v91, %v98
    %v101 = vshrl.u32 %v83, %v99
    %v102 = vor.u32 %v100, %v101
    %v103 = vsub.s32 4294967266, %v98
    %v104 = vadd.s32 %v103, 127
    %v105 = vshll.u32 %v104, 23
    %v106 = vor.u32 4788187, %v105
    %v107 = vand.u32 2147483647, %v106
    %v109 = vcvt.s32.f32 %v102
    %v110 = vmul.f32 %v109, %v107
    %v111 = vxor.u32 %v110, 2147483648
    %v112 = vsel %vm29, %v111, %v110
    %v113 = vsub.s32 4, %v89
    %v114 = vsel %vm29, %v113, %v89
    %v115 = vsel %vm28, %v23, %v112
    %v116 = vsel %vm28, 0, %v114
    %v117 = vcosq.f32.pop %v115
    %v118 = vsinq.f32.pop %v115
    %vm119 = vweird.f32 %v23
    %v120 = vand.u32 %v116, 3
    %vm121 = vcmp.lt.s32.totalorder %v120, 2
    %vm122 = vcmp.eq.s32.totalorder %v120, 0
    %v123 = vxor.u32 %v118, 2147483648
    %v124 = vsel %vm122, %v117, %v123
    %vm125 = vcmp.eq.s32.totalorder %v120, 2
    %v126 = vxor.u32 %v117, 2147483648
    %v127 = vsel %vm125, %v126, %v118
    %v128 = vsel %vm121, %v124, %v127
    %v129 = vsel %vm119, nan, %v128
    %v130 = vand.u32 2147483647, %v24
    %vm131 = vcmp.le.f32.partialorder %v130, 0.7853982
    %vm132 = vcmp.lt.s32.totalorder %v24, 0
    %v133 = vand.u32 %v24, 2139095040
    %v134 = vshrl.u32 %v133, 23
    %v135 = vsub.s32 %v134, 127
    %v136 = vand.u32 2147483647, %v24
    %v137 = vand.u32 %v136, 8388607
    %v138 = vor.u32 %v137, 8388608
    %v139 = vsub.s32 0, %v138
    %v140 = vadd.s32 %v135, 1
    %vm141 = vcmp.gt.s32.totalorder %v140, 0
    %v142 = vsel %vm141, %v140, 0
    %v143 = vshrl.u32 %v142, 5
    %v144 = vand.u32 %v142, 31
    %v145 = vsub.s32 32, %v144
    %v146 = vshrl.u32 683565275, %v145
    %v147 = vshll.u32 683565275, %v144
    %v148 = vshrl.u32 2475754826, %v145
    %v149 = vor.u32 %v147, %v148
    %v150 = vshll.u32 2475754826, %v144
    %v151 = vshrl.u32 2131351028, %v145
    %v152 = vor.u32 %v150, %v151
    %v153 = vshll.u32 2131351028, %v144
    %v154 = vshrl.u32 2102212464, %v145
    %v155 = vor.u32 %v153, %v154
    %v156 = vshll.u32 2102212464, %v144
    %v157 = vshrl.u32 920167782, %v145
    %v158 = vor.u32 %v156, %v157
    %v159 = vshll.u32 920167782, %v144
    %v160 = vshrl.u32 1326507024, %v145
    %v161 = vor.u32 %v159, %v160
    %vm162 = vcmp.lt.s32.totalorder %v143, 1
    %vm163 = vcmp.lt.s32.totalorder %v143, 2
    %vm164 = vcmp.lt.s32.totalorder %v143, 3
    %vm165 = vcmp.lt.s32.totalorder %v143, 4
    %v166 = vsel %vm162, %v146, %v149
    %v167 = vsel %vm165, %v155, 2102212464
    %v168 = vsel %vm164, %v152, %v167
    %v169 = vsel %vm163, %v166, %v168
    %v170 = vsel %vm162, %v149, %v152
    %v171 = vsel %vm165, %v158, 920167782
    %v172 = vsel %vm164, %v155, %v171
    %v173 = vsel %vm163, %v170, %v172
    %v174 = vsel %vm162, %v152, %v155
    %v175 = vsel %vm165, %v161, 1326507024
    %v176 = vsel %vm164, %v158, %v175
    %v177 = vsel %vm163, %v174, %v176
    %v178 = vshll.u32 %v138, 8
    %v179 = vmul.u32.u64.compose %v178, %v177
    %v180 = vextract.low.u32 %v179
    %v181 = vextract.high.u32 %v179
    %v182 = vmul.u32.u64.compose %v178, %v173
    %v183 = vextract.low.u32 %v182
    %v184 = vextract.high.u32 %v182
    %v185 = vmul.u32 %v178, %v169
    %v186 = vadd.s32 %v181, %v183
    %vm187 = vc.u32 %v181, %v183
    %v188 = vadd.s32 %v184, 1
    %v189 = vsel %vm187, %v188, %v184
    %v190 = vadd.s32 %v185, %v189
    %v191 = vadd.s32 %v190, 536870912
    %v192 = vshrl.u32 %v191, 30
    %v193 = vshll.u32 %v192, 30
    %v194 = vsub.s32 %v190, %v193
    %vm195 = vcmp.lt.s32.totalorder %v194, 0
    %v196 = vsub.s32 0, %v194
    %v197 = vsel %vm195, %v196, %v194
    %v198 = vclz %v197
    %v199 = vsub.s32 %v198, 2
    %vm200 = vcmp.gt.s32.totalorder 0, %v199
    %v201 = vsel %vm200, 0, %v199
    %v202 = vsub.s32 32, %v201
    %v203 = vshll.u32 %v194, %v201
    %v204 = vshrl.u32 %v186, %v202
    %v205 = vor.u32 %v203, %v204
    %v206 = vsub.s32 4294967266, %v201
    %v207 = vadd.s32 %v206, 127
    %v208 = vshll.u32 %v207, 23
    %v209 = vor.u32 4788187, %v208
    %v210 = vand.u32 2147483647, %v209
    %v212 = vcvt.s32.f32 %v205
    %v213 = vmul.f32 %v212, %v210
    %v214 = vxor.u32 %v213, 2147483648
    %v215 = vsel %vm132, %v214, %v213
    %v216 = vsub.s32 4, %v192
    %v217 = vsel %vm132, %v216, %v192
    %v218 = vsel %vm131, %v24, %v215
    %v219 = vsel %vm131, 0, %v217
    %v220 = vcosq.f32.pop %v218
    %v221 = vsinq.f32.pop %v218
    %vm222 = vweird.f32 %v24
    %v223 = vand.u32 %v219, 3
    %vm224 = vcmp.lt.s32.totalorder %v223, 2
    %vm225 = vcmp.eq.s32.totalorder %v223, 0
    %v226 = vxor.u32 %v221, 2147483648
    %v227 = vsel %vm225, %v220, %v226
    %vm228 = vcmp.eq.s32.totalorder %v223, 2
    %v229 = vxor.u32 %v220, 2147483648
    %v230 = vsel %vm228, %v229, %v221
    %v231 = vsel %vm224, %v227, %v230
    %v232 = vsel %vm222, nan, %v231
    %v233 = vand.u32 2147483647, %v25
    %vm234 = vcmp.le.f32.partialorder %v233, 0.7853982
    %vm235 = vcmp.lt.s32.totalorder %v25, 0
    %v236 = vand.u32 %v25, 2139095040
    %v237 = vshrl.u32 %v236, 23
    %v238 = vsub.s32 %v237, 127
    %v239 = vand.u32 2147483647, %v25
    %v240 = vand.u32 %v239, 8388607
    %v241 = vor.u32 %v240, 8388608
    %v242 = vsub.s32 0, %v241
    %v243 = vadd.s32 %v238, 1
    %vm244 = vcmp.gt.s32.totalorder %v243, 0
    %v245 = vsel %vm244, %v243, 0
    %v246 = vshrl.u32 %v245, 5
    %v247 = vand.u32 %v245, 31
    %v248 = vsub.s32 32, %v247
    %v249 = vshrl.u32 683565275, %v248
    %v250 = vshll.u32 683565275, %v247
    %v251 = vshrl.u32 2475754826, %v248
    %v252 = vor.u32 %v250, %v251
    %v253 = vshll.u32 2475754826, %v247
    %v254 = vshrl.u32 2131351028, %v248
    %v255 = vor.u32 %v253, %v254
    %v256 = vshll.u32 2131351028, %v247
    %v257 = vshrl.u32 2102212464, %v248
    %v258 = vor.u32 %v256, %v257
    %v259 = vshll.u32 2102212464, %v247
    %v260 = vshrl.u32 920167782, %v248
    %v261 = vor.u32 %v259, %v260
    %v262 = vshll.u32 920167782, %v247
    %v263 = vshrl.u32 1326507024, %v248
    %v264 = vor.u32 %v262, %v263
    %vm265 = vcmp.lt.s32.totalorder %v246, 1
    %vm266 = vcmp.lt.s32.totalorder %v246, 2
    %vm267 = vcmp.lt.s32.totalorder %v246, 3
    %vm268 = vcmp.lt.s32.totalorder %v246, 4
    %v269 = vsel %vm265, %v249, %v252
    %v270 = vsel %vm268, %v258, 2102212464
    %v271 = vsel %vm267, %v255, %v270
    %v272 = vsel %vm266, %v269, %v271
    %v273 = vsel %vm265, %v252, %v255
    %v274 = vsel %vm268, %v261, 920167782
    %v275 = vsel %vm267, %v258, %v274
    %v276 = vsel %vm266, %v273, %v275
    %v277 = vsel %vm265, %v255, %v258
    %v278 = vsel %vm268, %v264, 1326507024
    %v279 = vsel %vm267, %v261, %v278
    %v280 = vsel %vm266, %v277, %v279
    %v281 = vshll.u32 %v241, 8
    %v282 = vmul.u32.u64.compose %v281, %v280
    %v283 = vextract.low.u32 %v282
    %v284 = vextract.high.u32 %v282
    %v285 = vmul.u32.u64.compose %v281, %v276
    %v286 = vextract.low.u32 %v285
    %v287 = vextract.high.u32 %v285
    %v288 = vmul.u32 %v281, %v272
    %v289 = vadd.s32 %v284, %v286
    %vm290 = vc.u32 %v284, %v286
    %v291 = vadd.s32 %v287, 1
    %v292 = vsel %vm290, %v291, %v287
    %v293 = vadd.s32 %v288, %v292
    %v294 = vadd.s32 %v293, 536870912
    %v295 = vshrl.u32 %v294, 30
    %v296 = vshll.u32 %v295, 30
    %v297 = vsub.s32 %v293, %v296
    %vm298 = vcmp.lt.s32.totalorder %v297, 0
    %v299 = vsub.s32 0, %v297
    %v300 = vsel %vm298, %v299, %v297
    %v301 = vclz %v300
    %v302 = vsub.s32 %v301, 2
    %vm303 = vcmp.gt.s32.totalorder 0, %v302
    %v304 = vsel %vm303, 0, %v302
    %v305 = vsub.s32 32, %v304
    %v306 = vshll.u32 %v297, %v304
    %v307 = vshrl.u32 %v289, %v305
    %v308 = vor.u32 %v306, %v307
    %v309 = vsub.s32 4294967266, %v304
    %v310 = vadd.s32 %v309, 127
    %v311 = vshll.u32 %v310, 23
    %v312 = vor.u32 4788187, %v311
    %v313 = vand.u32 2147483647, %v312
    %v315 = vcvt.s32.f32 %v308
    %v316 = vmul.f32 %v315, %v313
    %v317 = vxor.u32 %v316, 2147483648
    %v318 = vsel %vm235, %v317, %v316
    %v319 = vsub.s32 4, %v295
    %v320 = vsel %vm235, %v319, %v295
    %v321 = vsel %vm234, %v25, %v318
    %v322 = vsel %vm234, 0, %v320
    %v323 = vcosq.f32.pop %v321
    %v324 = vsinq.f32.pop %v321
    %vm325 = vweird.f32 %v25
    %v326 = vand.u32 %v322, 3
    %vm327 = vcmp.lt.s32.totalorder %v326, 2
    %vm328 = vcmp.eq.s32.totalorder %v326, 0
    %v329 = vxor.u32 %v324, 2147483648
    %v330 = vsel %vm328, %v323, %v329
    %vm331 = vcmp.eq.s32.totalorder %v326, 2
    %v332 = vxor.u32 %v323, 2147483648
    %v333 = vsel %vm331, %v332, %v324
    %v334 = vsel %vm327, %v330, %v333
    %v335 = vsel %vm325, nan, %v334
    %v336 = vand.u32 2147483647, %v26
    %vm337 = vcmp.le.f32.partialorder %v336, 0.7853982
    %vm338 = vcmp.lt.s32.totalorder %v26, 0
    %v339 = vand.u32 %v26, 2139095040
    %v340 = vshrl.u32 %v339, 23
    %v341 = vsub.s32 %v340, 127
    %v342 = vand.u32 2147483647, %v26
    %v343 = vand.u32 %v342, 8388607
    %v344 = vor.u32 %v343, 8388608
    %v345 = vsub.s32 0, %v344
    %v346 = vadd.s32 %v341, 1
    %vm347 = vcmp.gt.s32.totalorder %v346, 0
    %v348 = vsel %vm347, %v346, 0
    %v349 = vshrl.u32 %v348, 5
    %v350 = vand.u32 %v348, 31
    %v351 = vsub.s32 32, %v350
    %v352 = vshrl.u32 683565275, %v351
    %v353 = vshll.u32 683565275, %v350
    %v354 = vshrl.u32 2475754826, %v351
    %v355 = vor.u32 %v353, %v354
    %v356 = vshll.u32 2475754826, %v350
    %v357 = vshrl.u32 2131351028, %v351
    %v358 = vor.u32 %v356, %v357
    %v359 = vshll.u32 2131351028, %v350
    %v360 = vshrl.u32 2102212464, %v351
    %v361 = vor.u32 %v359, %v360
    %v362 = vshll.u32 2102212464, %v350
    %v363 = vshrl.u32 920167782, %v351
    %v364 = vor.u32 %v362, %v363
    %v365 = vshll.u32 920167782, %v350
    %v366 = vshrl.u32 1326507024, %v351
    %v367 = vor.u32 %v365, %v366
    %vm368 = vcmp.lt.s32.totalorder %v349, 1
    %vm369 = vcmp.lt.s32.totalorder %v349, 2
    %vm370 = vcmp.lt.s32.totalorder %v349, 3
    %vm371 = vcmp.lt.s32.totalorder %v349, 4
    %v372 = vsel %vm368, %v352, %v355
    %v373 = vsel %vm371, %v361, 2102212464
    %v374 = vsel %vm370, %v358, %v373
    %v375 = vsel %vm369, %v372, %v374
    %v376 = vsel %vm368, %v355, %v358
    %v377 = vsel %vm371, %v364, 920167782
    %v378 = vsel %vm370, %v361, %v377
    %v379 = vsel %vm369, %v376, %v378
    %v380 = vsel %vm368, %v358, %v361
    %v381 = vsel %vm371, %v367, 1326507024
    %v382 = vsel %vm370, %v364, %v381
    %v383 = vsel %vm369, %v380, %v382
    %v384 = vshll.u32 %v344, 8
    %v385 = vmul.u32.u64.compose %v384, %v383
    %v386 = vextract.low.u32 %v385
    %v387 = vextract.high.u32 %v385
    %v388 = vmul.u32.u64.compose %v384, %v379
    %v389 = vextract.low.u32 %v388
    %v390 = vextract.high.u32 %v388
    %v391 = vmul.u32 %v384, %v375
    %v392 = vadd.s32 %v387, %v389
    %vm393 = vc.u32 %v387, %v389
    %v394 = vadd.s32 %v390, 1
    %v395 = vsel %vm393, %v394, %v390
    %v396 = vadd.s32 %v391, %v395
    %v397 = vadd.s32 %v396, 536870912
    %v398 = vshrl.u32 %v397, 30
    %v399 = vshll.u32 %v398, 30
    %v400 = vsub.s32 %v396, %v399
    %vm401 = vcmp.lt.s32.totalorder %v400, 0
    %v402 = vsub.s32 0, %v400
    %v403 = vsel %vm401, %v402, %v400
    %v404 = vclz %v403
    %v405 = vsub.s32 %v404, 2
    %vm406 = vcmp.gt.s32.totalorder 0, %v405
    %v407 = vsel %vm406, 0, %v405
    %v408 = vsub.s32 32, %v407
    %v409 = vshll.u32 %v400, %v407
    %v410 = vshrl.u32 %v392, %v408
    %v411 = vor.u32 %v409, %v410
    %v412 = vsub.s32 4294967266, %v407
    %v413 = vadd.s32 %v412, 127
    %v414 = vshll.u32 %v413, 23
    %v415 = vor.u32 4788187, %v414
    %v416 = vand.u32 2147483647, %v415
    %v418 = vcvt.s32.f32 %v411
    %v419 = vmul.f32 %v418, %v416
    %v420 = vxor.u32 %v419, 2147483648
    %v421 = vsel %vm338, %v420, %v419
    %v422 = vsub.s32 4, %v398
    %v423 = vsel %vm338, %v422, %v398
    %v424 = vsel %vm337, %v26, %v421
    %v425 = vsel %vm337, 0, %v423
    %v426 = vcosq.f32.pop %v424
    %v427 = vsinq.f32.pop %v424
    %vm428 = vweird.f32 %v26
    %v429 = vand.u32 %v425, 3
    %vm430 = vcmp.lt.s32.totalorder %v429, 2
    %vm431 = vcmp.eq.s32.totalorder %v429, 0
    %v432 = vxor.u32 %v427, 2147483648
    %v433 = vsel %vm431, %v426, %v432
    %vm434 = vcmp.eq.s32.totalorder %v429, 2
    %v435 = vxor.u32 %v426, 2147483648
    %v436 = vsel %vm434, %v435, %v427
    %v437 = vsel %vm430, %v433, %v436
    %v438 = vsel %vm428, nan, %v437
    %439 = vst [vmem:[#allocation5] sm:$0xff] %v129
    %440 = vst [vmem:[#allocation5 + $0x8] sm:$0xff] %v232
    %441 = vst [vmem:[#allocation5 + $0x10] sm:$0xff] %v335
    %442 = vst [vmem:[#allocation5 + $0x18] sm:$0x1] %v438
    // Predicated region
    $region10: #{tpu_custom_call.1} parent=1 // pred_check
      _
    $region11: #{tpu_custom_call.1} parent=1 // pred_check_branch
      %444 = sbr.rel (0) target = $region13
    $region12: #{tpu_custom_call.1} parent=1 // pred_region
      %s446 = ssub.s32 512, 512
      %447 = vsyncadd [#allocation4], %s446
      %s448 = sshll.u32 [#allocation5], 4
      %s449 = int_to_ptr.vmem [resolvable:$true] %s448
      %454 = dma.vmem_to_hbm [thread:$0]  %s449, 512, %s1, [#allocation4], 128, 128, 8
    $region13: #{tpu_custom_call.1} parent=1 // pred_fallthru
      _
    // Predicated region
    $region14: #{tpu_custom_call.1} parent=1 // pred_check
      _
    $region15: #{tpu_custom_call.1} parent=1 // pred_check_branch
      %456 = sbr.rel (0) target = $region17
    $region16: #{tpu_custom_call.1} parent=1 // pred_region
      %457 = dma.done [#allocation4], 512
    $region17: #{tpu_custom_call.1} parent=1 // pred_fallthru
      _
    %458 = vsyncpa [#allocation3], 1
    %459 = vsyncpa [#allocation4], 1

</llo_original>
